<compile_context>
chip_gen: v6e
topology: v6e:2x2x1
jax: 0.10.0
libtpu: 0.0.40
codegen_flags: <defaults>
</compile_context>

<pallas_src>
import functools

import jax
import jax.numpy as jnp
from jax import lax
from jax.experimental import pallas as pl
from jax.experimental.pallas import tpu as pltpu


_INV_SQRT2 = 0.7071067811865476
_SQRT_2_OVER_PI = 0.7978845608028654


def _erf(v):
    # Abramowitz & Stegun 7.1.26 rational approximation (max abs err ~1.5e-7).
    # Built only from exp / div / mul / add / where so it lowers on Mosaic
    # without relying on a native erf rule.
    a1 = 0.254829592
    a2 = -0.284496736
    a3 = 1.421413741
    a4 = -1.453152027
    a5 = 1.061405429
    p = 0.3275911
    av = jnp.abs(v)
    t = 1.0 / (1.0 + p * av)
    poly = ((((a5 * t + a4) * t + a3) * t + a2) * t + a1) * t
    y = 1.0 - poly * jnp.exp(-(av * av))
    return jnp.where(v >= 0.0, y, -y)


def _gelu(v, approx):
    if approx:
        # tanh approximation: transcendental goes to the EUP slot (perf mode,
        # deviates ~1e-3 from torch's default erf GELU).
        return 0.5 * v * (1.0 + jnp.tanh(_SQRT_2_OVER_PI * (v + 0.044715 * v * v * v)))
    # erf-faithful (matches torch.nn.functional.gelu default)
    return 0.5 * v * (1.0 + _erf(v * _INV_SQRT2))


def conv_block_kernel(x_ref, w0_ref, w1_ref, pc_ref, o_ref, *,
                      residual0: bool, ksize: int,
                      fused0: bool, fused1: bool, approx_gelu: bool):
    # x_ref : (spans, C_in,  L)   a few whole samples, original NCL layout
    # w0_ref: (C_out, k*C_in)     BN0-scale-folded im2col weights, conv0
    # w1_ref: (C_out, k*C_out)    BN1-scale-folded im2col weights, conv1
    # pc_ref: (C_out, 4)          packed per-channel [shift0, shift1, s0, s1]
    # o_ref : (spans, C_out, L)
    spans = x_ref.shape[0]
    pad = (ksize - 1) // 2
    cdt = w0_ref.dtype                         # MXU input dtype (bf16 or f32)

    pc = pc_ref[...]                           # (C_out, 4), f32
    shift0 = pc[:, 0:1]                        # s0*b0 + t0
    shift1 = pc[:, 1:2]                        # s1*b1 + t1
    s0 = pc[:, 2:3]                            # BN0 scale (residual term)
    s1 = pc[:, 3:4]                            # BN1 scale (residual term)

    def shift_tap(v, d):
        # t[:, l] = v[:, l + d] inside the sample, zero outside ('same' pad).
        if d == 0:
            return v
        c, length = v.shape
        zeros = jnp.zeros((c, abs(d)), v.dtype)
        if d > 0:
            return jnp.concatenate([v[:, d:], zeros], axis=1)
        return jnp.concatenate([zeros, v[:, : length + d]], axis=1)

    def conv(v, w_ref, fused):
        # v: (C, L) f32  ->  (C_out, L) f32.   MXU in `cdt`, f32 accumulation.
        taps = [shift_tap(v, k - pad) for k in range(ksize)]
        if fused:
            slab = taps[0] if ksize == 1 else jnp.concatenate(taps, axis=0)
            return jnp.dot(w_ref[...], slab.astype(cdt),
                           preferred_element_type=jnp.float32)
        c = v.shape[0]
        acc = jnp.dot(w_ref[:, :c], taps[0].astype(cdt),
                      preferred_element_type=jnp.float32)
        for k in range(1, ksize):
            acc = acc + jnp.dot(w_ref[:, k * c:(k + 1) * c], taps[k].astype(cdt),
                                preferred_element_type=jnp.float32)
        return acc

    # A handful of whole samples per grid step (static unroll, spans <= 8).
    for s in range(spans):
        x = x_ref[s].astype(jnp.float32)                       # (C_in, L)

        # ---- conv0 (+ optional residual) + folded BatchNorm0 + GELU ----
        a0 = conv(x, w0_ref, fused0) + shift0
        if residual0:                                          # in_dim == out_dim
            a0 = a0 + s0 * x
        h = _gelu(a0, approx_gelu)                             # (C_out, L) f32

        # ---- conv1 + residual + folded BatchNorm1 + GELU ----
        a1 = conv(h, w1_ref, fused1) + shift1 + s1 * h
        # TODO(synk): optional bf16 epilogue on v6e/v7x (bf16 VPU/EUP) skipped
        # to keep f32 parity with the torch reference.
        out = _gelu(a1, approx_gelu)

        # Dropout: identity in inference mode.
        # TODO(synk): training-mode dropout (pltpu.prng_*) not emitted.
        o_ref[s] = out.astype(o_ref.dtype)


def _pick_spans(n, c_in, c_out, seq_len, ksize, in_itemsize,
                budget_bytes=2 << 20, max_spans=8):
    # Rough per-sample VMEM need per grid step: double-buffered I/O blocks +
    # tap slabs for both convs + f32 temporaries.  Keep the grid length >= 2
    # so the pipeline has something to overlap (and both v7x TCs stay busy).
    per_sample = seq_len * (
        2 * (in_itemsize * c_in + 4 * c_out)          # x / out blocks, 2 buffers
        + in_itemsize * ksize * (c_in + c_out)        # conv tap slabs
        + 4 * 4 * c_out                               # a0, h, a1, out (f32)
    )
    spans = 1
    for d in range(2, min(n, max_spans) + 1):
        if n % d == 0 and n // d >= 2 and d * per_sample <= budget_bytes:
            spans = d
    return spans


def conv_block(x, params, *, kernel_size=3, eps=1e-5,
               compute_dtype=jnp.bfloat16, approx_gelu=False, mxu_depth=128):
    """Inference-mode ConvBlock forward.  x: (N, C_in, L) -> (N, C_out, L) f32."""
    n, c_in, seq_len = x.shape
    w0, b0, w1, b1, g0, be0, rm0, rv0, g1, be1, rm1, rv1 = params
    c_out = w0.shape[0]
    residual0 = (c_in == c_out)
    assert kernel_size % 2 == 1, "only odd kernel_size ('same' symmetric pad) supported"

    f32 = jnp.float32
    # Fold BatchNorm (eval mode, running stats) into per-channel scale/shift,
    # then fold the scale into the conv weights and the conv bias into a shift.
    s0 = (g0 / jnp.sqrt(rv0 + eps)).astype(f32)
    t0 = (be0 - rm0 * s0).astype(f32)
    s1 = (g1 / jnp.sqrt(rv1 + eps)).astype(f32)
    t1 = (be1 - rm1 * s1).astype(f32)

    # im2col weight layout (C_out, k*C) with the BN scale pre-multiplied.
    # Weights are tiny, so casting them to the MXU dtype in the wrapper is free.
    w0f = (s0[:, None, None] * jnp.transpose(w0, (0, 2, 1))
           ).reshape(c_out, kernel_size * c_in).astype(compute_dtype)
    w1f = (s1[:, None, None] * jnp.transpose(w1, (0, 2, 1))
           ).reshape(c_out, kernel_size * c_out).astype(compute_dtype)
    shift0 = (s0 * b0 + t0).astype(f32)
    shift1 = (s1 * b1 + t1).astype(f32)
    packed = jnp.stack([shift0, shift1, s0, s1], axis=1)       # (C_out, 4) f32

    # Fused im2col contraction only while it fits one MXU pass and the channel
    # count is sublane-aligned; otherwise accumulate k separate dots.
    fused0 = (kernel_size * c_in <= mxu_depth) and (c_in % 8 == 0)
    fused1 = (kernel_size * c_out <= mxu_depth) and (c_out % 8 == 0)

    spans = _pick_spans(n, c_in, c_out, seq_len, kernel_size, x.dtype.itemsize)
    grid = (n // spans,)

    kernel = functools.partial(
        conv_block_kernel, residual0=residual0, ksize=kernel_size,
        fused0=fused0, fused1=fused1, approx_gelu=approx_gelu)

    flops = 2 * n * seq_len * c_out * kernel_size * (c_in + c_out)
    bytes_accessed = (n * seq_len * c_in * x.dtype.itemsize
                      + n * seq_len * c_out * 4
                      + int(w0f.size) * w0f.dtype.itemsize
                      + int(w1f.size) * w1f.dtype.itemsize
                      + int(packed.size) * 4)

    out = pl.pallas_call(
        kernel,
        out_shape=jax.ShapeDtypeStruct((n, c_out, seq_len), f32),
        grid_spec=pltpu.PrefetchScalarGridSpec(
            num_scalar_prefetch=0,
            grid=grid,
            in_specs=[
                # x keeps its (N, C, L) HBM layout; one block = `spans` samples.
                pl.BlockSpec((spans, c_in, seq_len), lambda i: (i, 0, 0)),
                pl.BlockSpec(w0f.shape, lambda i: (0, 0)),
                pl.BlockSpec(w1f.shape, lambda i: (0, 0)),
                pl.BlockSpec(packed.shape, lambda i: (0, 0)),
            ],
            out_specs=pl.BlockSpec((spans, c_out, seq_len), lambda i: (i, 0, 0)),
        ),
        compiler_params=pltpu.CompilerParams(
            dimension_semantics=("parallel",),
            vmem_limit_bytes=32 * 1024 * 1024,
        ),
        cost_estimate=pl.CostEstimate(
            flops=int(flops),
            transcendentals=int(2 * n * seq_len * c_out),
            bytes_accessed=int(bytes_accessed),
        ),
    )(x, w0f, w1f, packed)
    return out


# ---------------------- pure-JAX reference (for validation) ----------------------
def conv_block_ref(x, params, *, kernel_size=3, eps=1e-5):
    w0, b0, w1, b1, g0, be0, rm0, rv0, g1, be1, rm1, rv1 = params
    c_in, c_out = x.shape[1], w0.shape[0]
    pad = (kernel_size - 1) // 2

    def conv1d_same(inp, w, b):
        y = lax.conv_general_dilated(inp, w, window_strides=(1,),
                                     padding=[(pad, pad)],
                                     dimension_numbers=("NCH", "OIH", "NCH"))
        return y + b[None, :, None]

    def bn(inp, g, be, rm, rv):
        return ((inp - rm[None, :, None]) / jnp.sqrt(rv[None, :, None] + eps)
                * g[None, :, None] + be[None, :, None])

    gelu = lambda v: 0.5 * v * (1.0 + lax.erf(v / jnp.sqrt(2.0)))

    h = conv1d_same(x, w0, b0)
    if c_in == c_out:
        h = h + x
    h = gelu(bn(h, g0, be0, rm0, rv0))
    h = conv1d_same(h, w1, b1) + h
    h = gelu(bn(h, g1, be1, rm1, rv1))
    return h  # dropout = identity in eval mode


if __name__ == "__main__":
    def make_params(key, c_in, c_out, k):
        ks = jax.random.split(key, 12)
        w0 = jax.random.normal(ks[0], (c_out, c_in, k), jnp.float32) * 0.2
        b0 = jax.random.normal(ks[1], (c_out,), jnp.float32) * 0.1
        w1 = jax.random.normal(ks[2], (c_out, c_out, k), jnp.float32) * 0.2
        b1 = jax.random.normal(ks[3], (c_out,), jnp.float32) * 0.1
        g0 = 1.0 + 0.1 * jax.random.normal(ks[4], (c_out,), jnp.float32)
        be0 = 0.1 * jax.random.normal(ks[5], (c_out,), jnp.float32)
        g1 = 1.0 + 0.1 * jax.random.normal(ks[6], (c_out,), jnp.float32)
        be1 = 0.1 * jax.random.normal(ks[7], (c_out,), jnp.float32)
        rm0 = 0.1 * jax.random.normal(ks[8], (c_out,), jnp.float32)
        rv0 = 1.0 + 0.2 * jax.random.uniform(ks[9], (c_out,), jnp.float32)
        rm1 = 0.1 * jax.random.normal(ks[10], (c_out,), jnp.float32)
        rv1 = 1.0 + 0.2 * jax.random.uniform(ks[11], (c_out,), jnp.float32)
        return (w0, b0, w1, b1, g0, be0, rm0, rv0, g1, be1, rm1, rv1)

    key = jax.random.PRNGKey(0)
    kp_a, kx_a, kp_b, kx_b = jax.random.split(key, 4)

    # -- Config A: in_dim == out_dim (conv0 residual), L = 128 -----------------
    N, CI, CO, L, K = 4, 8, 8, 128, 3
    params_a = make_params(kp_a, CI, CO, K)
    x_a = jax.random.normal(kx_a, (N, CI, L), jnp.float32)
    ref_a = jax.block_until_ready(conv_block_ref(x_a, params_a, kernel_size=K))

    # exact-semantics check (f32 MXU path)
    out_a32 = jax.block_until_ready(
        conv_block(x_a, params_a, kernel_size=K, compute_dtype=jnp.float32))
    assert out_a32.shape == (N, CO, L), out_a32.shape
    err = float(jnp.max(jnp.abs(out_a32 - ref_a)))
    assert err < 1e-4, f"f32 path mismatch: {err}"

    # performance path (bf16 MXU inputs, f32 accumulate / epilogue)
    out_abf = jax.block_until_ready(
        conv_block(x_a, params_a, kernel_size=K, compute_dtype=jnp.bfloat16))
    err = float(jnp.max(jnp.abs(out_abf - ref_a)))
    assert err < 1e-1, f"bf16 path mismatch: {err}"

    # -- Config B: in_dim != out_dim, non-aligned channels / length ------------
    N, CI, CO, L, K = 2, 4, 8, 96, 3
    params_b = make_params(kp_b, CI, CO, K)
    x_b = jax.random.normal(kx_b, (N, CI, L), jnp.float32)
    out_b = jax.block_until_ready(
        conv_block(x_b, params_b, kernel_size=K, compute_dtype=jnp.float32))
    ref_b = conv_block_ref(x_b, params_b, kernel_size=K)
    err = float(jnp.max(jnp.abs(out_b - ref_b)))
    assert err < 1e-4, f"f32 path mismatch (config B): {err}"

    print("KERNEL_OK")
</pallas_src>

<mosaic_0001>
module attributes {stable_mosaic.version = 11 : i64} {
  func.func @conv_block_kernel(%arg0: i32, %arg1: memref<2x8x128xf32, #tpu.memory_space<vmem>>, %arg2: memref<8x24xf32, #tpu.memory_space<vmem>>, %arg3: memref<8x24xf32, #tpu.memory_space<vmem>>, %arg4: memref<8x4xf32, #tpu.memory_space<vmem>>, %arg5: memref<2x8x128xf32, #tpu.memory_space<vmem>>) attributes {dimension_semantics = [#tpu.dimension_semantics<parallel>], iteration_bounds = array<i64: 2>, scalar_prefetch = 0 : i64, scratch_operands = 0 : i64, tpu.core_type = #tpu.core_type<tc>, window_params = [{transform_indices = @transform_0, window_bounds = array<i64: 2, 8, 128>}, {pipeline_mode = #tpu.pipeline_mode<synchronous>, transform_indices = @transform_1, window_bounds = array<i64: 8, 24>}, {pipeline_mode = #tpu.pipeline_mode<synchronous>, transform_indices = @transform_2, window_bounds = array<i64: 8, 24>}, {pipeline_mode = #tpu.pipeline_mode<synchronous>, transform_indices = @transform_3, window_bounds = array<i64: 8, 4>}, {transform_indices = @transform_4, window_bounds = array<i64: 2, 8, 128>}]} {
    %c0 = arith.constant 0 : index
    %c0_0 = arith.constant 0 : index
    %0 = vector.load %arg4[%c0, %c0_0] : memref<8x4xf32, #tpu.memory_space<vmem>>, vector<8x4xf32>
    %1 = vector.extract_strided_slice %0 {offsets = [0, 0], sizes = [8, 1], strides = [1, 1]} : vector<8x4xf32> to vector<8x1xf32>
    %2 = vector.extract_strided_slice %0 {offsets = [0, 1], sizes = [8, 1], strides = [1, 1]} : vector<8x4xf32> to vector<8x1xf32>
    %3 = vector.extract_strided_slice %0 {offsets = [0, 2], sizes = [8, 1], strides = [1, 1]} : vector<8x4xf32> to vector<8x1xf32>
    %4 = vector.extract_strided_slice %0 {offsets = [0, 3], sizes = [8, 1], strides = [1, 1]} : vector<8x4xf32> to vector<8x1xf32>
    %c0_1 = arith.constant 0 : index
    %c0_2 = arith.constant 0 : index
    %c0_3 = arith.constant 0 : index
    %5 = vector.load %arg1[%c0_1, %c0_2, %c0_3] : memref<2x8x128xf32, #tpu.memory_space<vmem>>, vector<1x8x128xf32>
    %6 = vector.shape_cast %5 : vector<1x8x128xf32> to vector<8x128xf32>
    %cst = arith.constant 0.000000e+00 : f32
    %7 = vector.broadcast %cst : f32 to vector<8x1xf32>
    %8 = vector.extract_strided_slice %6 {offsets = [0, 0], sizes = [8, 127], strides = [1, 1]} : vector<8x128xf32> to vector<8x127xf32>
    %9 = tpu.concatenate %7, %8 in 1 : vector<8x1xf32>, vector<8x127xf32> -> vector<8x128xf32>
    %cst_4 = arith.constant 0.000000e+00 : f32
    %10 = vector.broadcast %cst_4 : f32 to vector<8x1xf32>
    %11 = vector.extract_strided_slice %6 {offsets = [0, 1], sizes = [8, 127], strides = [1, 1]} : vector<8x128xf32> to vector<8x127xf32>
    %12 = tpu.concatenate %11, %10 in 1 : vector<8x127xf32>, vector<8x1xf32> -> vector<8x128xf32>
    %13 = tpu.concatenate %9, %6, %12 in 0 : vector<8x128xf32>, vector<8x128xf32>, vector<8x128xf32> -> vector<24x128xf32>
    %c0_5 = arith.constant 0 : index
    %c0_6 = arith.constant 0 : index
    %14 = vector.load %arg2[%c0_5, %c0_6] : memref<8x24xf32, #tpu.memory_space<vmem>>, vector<8x24xf32>
    %cst_7 = arith.constant dense<0.000000e+00> : vector<8x128xf32>
    %15 = tpu.matmul %14, %13, %cst_7 {dimension_numbers = #tpu.dot_dimension_numbers<[1], [0], [0], [1], [0, 0, 1, 1], [], []>} : vector<8x24xf32>, vector<24x128xf32>, vector<8x128xf32> -> vector<8x128xf32>
    %16 = vector.broadcast %1 : vector<8x1xf32> to vector<8x128xf32>
    %17 = arith.addf %15, %16 : vector<8x128xf32>
    %18 = vector.broadcast %3 : vector<8x1xf32> to vector<8x128xf32>
    %19 = arith.mulf %18, %6 : vector<8x128xf32>
    %20 = arith.addf %17, %19 : vector<8x128xf32>
    %cst_8 = arith.constant 5.000000e-01 : f32
    %21 = vector.broadcast %cst_8 : f32 to vector<8x128xf32>
    %22 = arith.mulf %21, %20 : vector<8x128xf32>
    %cst_9 = arith.constant 0.707106769 : f32
    %23 = vector.broadcast %cst_9 : f32 to vector<8x128xf32>
    %24 = arith.mulf %20, %23 : vector<8x128xf32>
    %25 = math.absf %24 : vector<8x128xf32>
    %cst_10 = arith.constant 0.327591091 : f32
    %26 = vector.broadcast %cst_10 : f32 to vector<8x128xf32>
    %27 = arith.mulf %26, %25 : vector<8x128xf32>
    %cst_11 = arith.constant 1.000000e+00 : f32
    %28 = vector.broadcast %cst_11 : f32 to vector<8x128xf32>
    %29 = arith.addf %28, %27 : vector<8x128xf32>
    %cst_12 = arith.constant 1.000000e+00 : f32
    %30 = vector.broadcast %cst_12 : f32 to vector<8x128xf32>
    %31 = arith.divf %30, %29 : vector<8x128xf32>
    %cst_13 = arith.constant 1.06140542 : f32
    %32 = vector.broadcast %cst_13 : f32 to vector<8x128xf32>
    %33 = arith.mulf %32, %31 : vector<8x128xf32>
    %cst_14 = arith.constant -1.45315206 : f32
    %34 = vector.broadcast %cst_14 : f32 to vector<8x128xf32>
    %35 = arith.addf %33, %34 : vector<8x128xf32>
    %36 = arith.mulf %35, %31 : vector<8x128xf32>
    %cst_15 = arith.constant 1.42141378 : f32
    %37 = vector.broadcast %cst_15 : f32 to vector<8x128xf32>
    %38 = arith.addf %36, %37 : vector<8x128xf32>
    %39 = arith.mulf %38, %31 : vector<8x128xf32>
    %cst_16 = arith.constant -0.284496725 : f32
    %40 = vector.broadcast %cst_16 : f32 to vector<8x128xf32>
    %41 = arith.addf %39, %40 : vector<8x128xf32>
    %42 = arith.mulf %41, %31 : vector<8x128xf32>
    %cst_17 = arith.constant 0.254829586 : f32
    %43 = vector.broadcast %cst_17 : f32 to vector<8x128xf32>
    %44 = arith.addf %42, %43 : vector<8x128xf32>
    %45 = arith.mulf %44, %31 : vector<8x128xf32>
    %46 = arith.mulf %25, %25 : vector<8x128xf32>
    %cst_18 = arith.constant 0.000000e+00 : f32
    %47 = vector.broadcast %cst_18 : f32 to vector<8x128xf32>
    %48 = arith.subf %47, %46 : vector<8x128xf32>
    %49 = math.exp %48 : vector<8x128xf32>
    %50 = arith.mulf %45, %49 : vector<8x128xf32>
    %cst_19 = arith.constant 1.000000e+00 : f32
    %51 = vector.broadcast %cst_19 : f32 to vector<8x128xf32>
    %52 = arith.subf %51, %50 : vector<8x128xf32>
    %cst_20 = arith.constant 0.000000e+00 : f32
    %53 = vector.broadcast %cst_20 : f32 to vector<8x128xf32>
    %54 = arith.cmpf oge, %24, %53 : vector<8x128xf32>
    %cst_21 = arith.constant 0.000000e+00 : f32
    %55 = vector.broadcast %cst_21 : f32 to vector<8x128xf32>
    %56 = arith.subf %55, %52 : vector<8x128xf32>
    %57 = arith.select %54, %52, %56 : vector<8x128xi1>, vector<8x128xf32>
    %cst_22 = arith.constant 1.000000e+00 : f32
    %58 = vector.broadcast %cst_22 : f32 to vector<8x128xf32>
    %59 = arith.addf %58, %57 : vector<8x128xf32>
    %60 = arith.mulf %22, %59 : vector<8x128xf32>
    %cst_23 = arith.constant 0.000000e+00 : f32
    %61 = vector.broadcast %cst_23 : f32 to vector<8x1xf32>
    %62 = vector.extract_strided_slice %60 {offsets = [0, 0], sizes = [8, 127], strides = [1, 1]} : vector<8x128xf32> to vector<8x127xf32>
    %63 = tpu.concatenate %61, %62 in 1 : vector<8x1xf32>, vector<8x127xf32> -> vector<8x128xf32>
    %cst_24 = arith.constant 0.000000e+00 : f32
    %64 = vector.broadcast %cst_24 : f32 to vector<8x1xf32>
    %65 = vector.extract_strided_slice %60 {offsets = [0, 1], sizes = [8, 127], strides = [1, 1]} : vector<8x128xf32> to vector<8x127xf32>
    %66 = tpu.concatenate %65, %64 in 1 : vector<8x127xf32>, vector<8x1xf32> -> vector<8x128xf32>
    %67 = tpu.concatenate %63, %60, %66 in 0 : vector<8x128xf32>, vector<8x128xf32>, vector<8x128xf32> -> vector<24x128xf32>
    %c0_25 = arith.constant 0 : index
    %c0_26 = arith.constant 0 : index
    %68 = vector.load %arg3[%c0_25, %c0_26] : memref<8x24xf32, #tpu.memory_space<vmem>>, vector<8x24xf32>
    %cst_27 = arith.constant dense<0.000000e+00> : vector<8x128xf32>
    %69 = tpu.matmul %68, %67, %cst_27 {dimension_numbers = #tpu.dot_dimension_numbers<[1], [0], [0], [1], [0, 0, 1, 1], [], []>} : vector<8x24xf32>, vector<24x128xf32>, vector<8x128xf32> -> vector<8x128xf32>
    %70 = vector.broadcast %2 : vector<8x1xf32> to vector<8x128xf32>
    %71 = arith.addf %69, %70 : vector<8x128xf32>
    %72 = vector.broadcast %4 : vector<8x1xf32> to vector<8x128xf32>
    %73 = arith.mulf %72, %60 : vector<8x128xf32>
    %74 = arith.addf %71, %73 : vector<8x128xf32>
    %cst_28 = arith.constant 5.000000e-01 : f32
    %75 = vector.broadcast %cst_28 : f32 to vector<8x128xf32>
    %76 = arith.mulf %75, %74 : vector<8x128xf32>
    %cst_29 = arith.constant 0.707106769 : f32
    %77 = vector.broadcast %cst_29 : f32 to vector<8x128xf32>
    %78 = arith.mulf %74, %77 : vector<8x128xf32>
    %79 = math.absf %78 : vector<8x128xf32>
    %cst_30 = arith.constant 0.327591091 : f32
    %80 = vector.broadcast %cst_30 : f32 to vector<8x128xf32>
    %81 = arith.mulf %80, %79 : vector<8x128xf32>
    %cst_31 = arith.constant 1.000000e+00 : f32
    %82 = vector.broadcast %cst_31 : f32 to vector<8x128xf32>
    %83 = arith.addf %82, %81 : vector<8x128xf32>
    %cst_32 = arith.constant 1.000000e+00 : f32
    %84 = vector.broadcast %cst_32 : f32 to vector<8x128xf32>
    %85 = arith.divf %84, %83 : vector<8x128xf32>
    %cst_33 = arith.constant 1.06140542 : f32
    %86 = vector.broadcast %cst_33 : f32 to vector<8x128xf32>
    %87 = arith.mulf %86, %85 : vector<8x128xf32>
    %cst_34 = arith.constant -1.45315206 : f32
    %88 = vector.broadcast %cst_34 : f32 to vector<8x128xf32>
    %89 = arith.addf %87, %88 : vector<8x128xf32>
    %90 = arith.mulf %89, %85 : vector<8x128xf32>
    %cst_35 = arith.constant 1.42141378 : f32
    %91 = vector.broadcast %cst_35 : f32 to vector<8x128xf32>
    %92 = arith.addf %90, %91 : vector<8x128xf32>
    %93 = arith.mulf %92, %85 : vector<8x128xf32>
    %cst_36 = arith.constant -0.284496725 : f32
    %94 = vector.broadcast %cst_36 : f32 to vector<8x128xf32>
    %95 = arith.addf %93, %94 : vector<8x128xf32>
    %96 = arith.mulf %95, %85 : vector<8x128xf32>
    %cst_37 = arith.constant 0.254829586 : f32
    %97 = vector.broadcast %cst_37 : f32 to vector<8x128xf32>
    %98 = arith.addf %96, %97 : vector<8x128xf32>
    %99 = arith.mulf %98, %85 : vector<8x128xf32>
    %100 = arith.mulf %79, %79 : vector<8x128xf32>
    %cst_38 = arith.constant 0.000000e+00 : f32
    %101 = vector.broadcast %cst_38 : f32 to vector<8x128xf32>
    %102 = arith.subf %101, %100 : vector<8x128xf32>
    %103 = math.exp %102 : vector<8x128xf32>
    %104 = arith.mulf %99, %103 : vector<8x128xf32>
    %cst_39 = arith.constant 1.000000e+00 : f32
    %105 = vector.broadcast %cst_39 : f32 to vector<8x128xf32>
    %106 = arith.subf %105, %104 : vector<8x128xf32>
    %cst_40 = arith.constant 0.000000e+00 : f32
    %107 = vector.broadcast %cst_40 : f32 to vector<8x128xf32>
    %108 = arith.cmpf oge, %78, %107 : vector<8x128xf32>
    %cst_41 = arith.constant 0.000000e+00 : f32
    %109 = vector.broadcast %cst_41 : f32 to vector<8x128xf32>
    %110 = arith.subf %109, %106 : vector<8x128xf32>
    %111 = arith.select %108, %106, %110 : vector<8x128xi1>, vector<8x128xf32>
    %cst_42 = arith.constant 1.000000e+00 : f32
    %112 = vector.broadcast %cst_42 : f32 to vector<8x128xf32>
    %113 = arith.addf %112, %111 : vector<8x128xf32>
    %114 = arith.mulf %76, %113 : vector<8x128xf32>
    %c0_43 = arith.constant 0 : index
    %c0_44 = arith.constant 0 : index
    %c0_45 = arith.constant 0 : index
    %115 = vector.load %arg5[%c0_43, %c0_44, %c0_45] : memref<2x8x128xf32, #tpu.memory_space<vmem>>, vector<1x8x128xf32>
    %116 = vector.shape_cast %115 : vector<1x8x128xf32> to vector<8x128xf32>
    %117 = vector.shape_cast %114 : vector<8x128xf32> to vector<1x8x128xf32>
    tpu.vector_store %arg5[%c0_43, %c0_44, %c0_45], %117 {strides = array<i32>} : memref<2x8x128xf32, #tpu.memory_space<vmem>>, vector<1x8x128xf32>,
    %c1 = arith.constant 1 : index
    %c0_46 = arith.constant 0 : index
    %c0_47 = arith.constant 0 : index
    %118 = vector.load %arg1[%c1, %c0_46, %c0_47] : memref<2x8x128xf32, #tpu.memory_space<vmem>>, vector<1x8x128xf32>
    %119 = vector.shape_cast %118 : vector<1x8x128xf32> to vector<8x128xf32>
    %cst_48 = arith.constant 0.000000e+00 : f32
    %120 = vector.broadcast %cst_48 : f32 to vector<8x1xf32>
    %121 = vector.extract_strided_slice %119 {offsets = [0, 0], sizes = [8, 127], strides = [1, 1]} : vector<8x128xf32> to vector<8x127xf32>
    %122 = tpu.concatenate %120, %121 in 1 : vector<8x1xf32>, vector<8x127xf32> -> vector<8x128xf32>
    %cst_49 = arith.constant 0.000000e+00 : f32
    %123 = vector.broadcast %cst_49 : f32 to vector<8x1xf32>
    %124 = vector.extract_strided_slice %119 {offsets = [0, 1], sizes = [8, 127], strides = [1, 1]} : vector<8x128xf32> to vector<8x127xf32>
    %125 = tpu.concatenate %124, %123 in 1 : vector<8x127xf32>, vector<8x1xf32> -> vector<8x128xf32>
    %126 = tpu.concatenate %122, %119, %125 in 0 : vector<8x128xf32>, vector<8x128xf32>, vector<8x128xf32> -> vector<24x128xf32>
    %c0_50 = arith.constant 0 : index
    %c0_51 = arith.constant 0 : index
    %127 = vector.load %arg2[%c0_50, %c0_51] : memref<8x24xf32, #tpu.memory_space<vmem>>, vector<8x24xf32>
    %cst_52 = arith.constant dense<0.000000e+00> : vector<8x128xf32>
    %128 = tpu.matmul %127, %126, %cst_52 {dimension_numbers = #tpu.dot_dimension_numbers<[1], [0], [0], [1], [0, 0, 1, 1], [], []>} : vector<8x24xf32>, vector<24x128xf32>, vector<8x128xf32> -> vector<8x128xf32>
    %129 = vector.broadcast %1 : vector<8x1xf32> to vector<8x128xf32>
    %130 = arith.addf %128, %129 : vector<8x128xf32>
    %131 = vector.broadcast %3 : vector<8x1xf32> to vector<8x128xf32>
    %132 = arith.mulf %131, %119 : vector<8x128xf32>
    %133 = arith.addf %130, %132 : vector<8x128xf32>
    %cst_53 = arith.constant 5.000000e-01 : f32
    %134 = vector.broadcast %cst_53 : f32 to vector<8x128xf32>
    %135 = arith.mulf %134, %133 : vector<8x128xf32>
    %cst_54 = arith.constant 0.707106769 : f32
    %136 = vector.broadcast %cst_54 : f32 to vector<8x128xf32>
    %137 = arith.mulf %133, %136 : vector<8x128xf32>
    %138 = math.absf %137 : vector<8x128xf32>
    %cst_55 = arith.constant 0.327591091 : f32
    %139 = vector.broadcast %cst_55 : f32 to vector<8x128xf32>
    %140 = arith.mulf %139, %138 : vector<8x128xf32>
    %cst_56 = arith.constant 1.000000e+00 : f32
    %141 = vector.broadcast %cst_56 : f32 to vector<8x128xf32>
    %142 = arith.addf %141, %140 : vector<8x128xf32>
    %cst_57 = arith.constant 1.000000e+00 : f32
    %143 = vector.broadcast %cst_57 : f32 to vector<8x128xf32>
    %144 = arith.divf %143, %142 : vector<8x128xf32>
    %cst_58 = arith.constant 1.06140542 : f32
    %145 = vector.broadcast %cst_58 : f32 to vector<8x128xf32>
    %146 = arith.mulf %145, %144 : vector<8x128xf32>
    %cst_59 = arith.constant -1.45315206 : f32
    %147 = vector.broadcast %cst_59 : f32 to vector<8x128xf32>
    %148 = arith.addf %146, %147 : vector<8x128xf32>
    %149 = arith.mulf %148, %144 : vector<8x128xf32>
    %cst_60 = arith.constant 1.42141378 : f32
    %150 = vector.broadcast %cst_60 : f32 to vector<8x128xf32>
    %151 = arith.addf %149, %150 : vector<8x128xf32>
    %152 = arith.mulf %151, %144 : vector<8x128xf32>
    %cst_61 = arith.constant -0.284496725 : f32
    %153 = vector.broadcast %cst_61 : f32 to vector<8x128xf32>
    %154 = arith.addf %152, %153 : vector<8x128xf32>
    %155 = arith.mulf %154, %144 : vector<8x128xf32>
    %cst_62 = arith.constant 0.254829586 : f32
    %156 = vector.broadcast %cst_62 : f32 to vector<8x128xf32>
    %157 = arith.addf %155, %156 : vector<8x128xf32>
    %158 = arith.mulf %157, %144 : vector<8x128xf32>
    %159 = arith.mulf %138, %138 : vector<8x128xf32>
    %cst_63 = arith.constant 0.000000e+00 : f32
    %160 = vector.broadcast %cst_63 : f32 to vector<8x128xf32>
    %161 = arith.subf %160, %159 : vector<8x128xf32>
    %162 = math.exp %161 : vector<8x128xf32>
    %163 = arith.mulf %158, %162 : vector<8x128xf32>
    %cst_64 = arith.constant 1.000000e+00 : f32
    %164 = vector.broadcast %cst_64 : f32 to vector<8x128xf32>
    %165 = arith.subf %164, %163 : vector<8x128xf32>
    %cst_65 = arith.constant 0.000000e+00 : f32
    %166 = vector.broadcast %cst_65 : f32 to vector<8x128xf32>
    %167 = arith.cmpf oge, %137, %166 : vector<8x128xf32>
    %cst_66 = arith.constant 0.000000e+00 : f32
    %168 = vector.broadcast %cst_66 : f32 to vector<8x128xf32>
    %169 = arith.subf %168, %165 : vector<8x128xf32>
    %170 = arith.select %167, %165, %169 : vector<8x128xi1>, vector<8x128xf32>
    %cst_67 = arith.constant 1.000000e+00 : f32
    %171 = vector.broadcast %cst_67 : f32 to vector<8x128xf32>
    %172 = arith.addf %171, %170 : vector<8x128xf32>
    %173 = arith.mulf %135, %172 : vector<8x128xf32>
    %cst_68 = arith.constant 0.000000e+00 : f32
    %174 = vector.broadcast %cst_68 : f32 to vector<8x1xf32>
    %175 = vector.extract_strided_slice %173 {offsets = [0, 0], sizes = [8, 127], strides = [1, 1]} : vector<8x128xf32> to vector<8x127xf32>
    %176 = tpu.concatenate %174, %175 in 1 : vector<8x1xf32>, vector<8x127xf32> -> vector<8x128xf32>
    %cst_69 = arith.constant 0.000000e+00 : f32
    %177 = vector.broadcast %cst_69 : f32 to vector<8x1xf32>
    %178 = vector.extract_strided_slice %173 {offsets = [0, 1], sizes = [8, 127], strides = [1, 1]} : vector<8x128xf32> to vector<8x127xf32>
    %179 = tpu.concatenate %178, %177 in 1 : vector<8x127xf32>, vector<8x1xf32> -> vector<8x128xf32>
    %180 = tpu.concatenate %176, %173, %179 in 0 : vector<8x128xf32>, vector<8x128xf32>, vector<8x128xf32> -> vector<24x128xf32>
    %c0_70 = arith.constant 0 : index
    %c0_71 = arith.constant 0 : index
    %181 = vector.load %arg3[%c0_70, %c0_71] : memref<8x24xf32, #tpu.memory_space<vmem>>, vector<8x24xf32>
    %cst_72 = arith.constant dense<0.000000e+00> : vector<8x128xf32>
    %182 = tpu.matmul %181, %180, %cst_72 {dimension_numbers = #tpu.dot_dimension_numbers<[1], [0], [0], [1], [0, 0, 1, 1], [], []>} : vector<8x24xf32>, vector<24x128xf32>, vector<8x128xf32> -> vector<8x128xf32>
    %183 = vector.broadcast %2 : vector<8x1xf32> to vector<8x128xf32>
    %184 = arith.addf %182, %183 : vector<8x128xf32>
    %185 = vector.broadcast %4 : vector<8x1xf32> to vector<8x128xf32>
    %186 = arith.mulf %185, %173 : vector<8x128xf32>
    %187 = arith.addf %184, %186 : vector<8x128xf32>
    %cst_73 = arith.constant 5.000000e-01 : f32
    %188 = vector.broadcast %cst_73 : f32 to vector<8x128xf32>
    %189 = arith.mulf %188, %187 : vector<8x128xf32>
    %cst_74 = arith.constant 0.707106769 : f32
    %190 = vector.broadcast %cst_74 : f32 to vector<8x128xf32>
    %191 = arith.mulf %187, %190 : vector<8x128xf32>
    %192 = math.absf %191 : vector<8x128xf32>
    %cst_75 = arith.constant 0.327591091 : f32
    %193 = vector.broadcast %cst_75 : f32 to vector<8x128xf32>
    %194 = arith.mulf %193, %192 : vector<8x128xf32>
    %cst_76 = arith.constant 1.000000e+00 : f32
    %195 = vector.broadcast %cst_76 : f32 to vector<8x128xf32>
    %196 = arith.addf %195, %194 : vector<8x128xf32>
    %cst_77 = arith.constant 1.000000e+00 : f32
    %197 = vector.broadcast %cst_77 : f32 to vector<8x128xf32>
    %198 = arith.divf %197, %196 : vector<8x128xf32>
    %cst_78 = arith.constant 1.06140542 : f32
    %199 = vector.broadcast %cst_78 : f32 to vector<8x128xf32>
    %200 = arith.mulf %199, %198 : vector<8x128xf32>
    %cst_79 = arith.constant -1.45315206 : f32
    %201 = vector.broadcast %cst_79 : f32 to vector<8x128xf32>
    %202 = arith.addf %200, %201 : vector<8x128xf32>
    %203 = arith.mulf %202, %198 : vector<8x128xf32>
    %cst_80 = arith.constant 1.42141378 : f32
    %204 = vector.broadcast %cst_80 : f32 to vector<8x128xf32>
    %205 = arith.addf %203, %204 : vector<8x128xf32>
    %206 = arith.mulf %205, %198 : vector<8x128xf32>
    %cst_81 = arith.constant -0.284496725 : f32
    %207 = vector.broadcast %cst_81 : f32 to vector<8x128xf32>
    %208 = arith.addf %206, %207 : vector<8x128xf32>
    %209 = arith.mulf %208, %198 : vector<8x128xf32>
    %cst_82 = arith.constant 0.254829586 : f32
    %210 = vector.broadcast %cst_82 : f32 to vector<8x128xf32>
    %211 = arith.addf %209, %210 : vector<8x128xf32>
    %212 = arith.mulf %211, %198 : vector<8x128xf32>
    %213 = arith.mulf %192, %192 : vector<8x128xf32>
    %cst_83 = arith.constant 0.000000e+00 : f32
    %214 = vector.broadcast %cst_83 : f32 to vector<8x128xf32>
    %215 = arith.subf %214, %213 : vector<8x128xf32>
    %216 = math.exp %215 : vector<8x128xf32>
    %217 = arith.mulf %212, %216 : vector<8x128xf32>
    %cst_84 = arith.constant 1.000000e+00 : f32
    %218 = vector.broadcast %cst_84 : f32 to vector<8x128xf32>
    %219 = arith.subf %218, %217 : vector<8x128xf32>
    %cst_85 = arith.constant 0.000000e+00 : f32
    %220 = vector.broadcast %cst_85 : f32 to vector<8x128xf32>
    %221 = arith.cmpf oge, %191, %220 : vector<8x128xf32>
    %cst_86 = arith.constant 0.000000e+00 : f32
    %222 = vector.broadcast %cst_86 : f32 to vector<8x128xf32>
    %223 = arith.subf %222, %219 : vector<8x128xf32>
    %224 = arith.select %221, %219, %223 : vector<8x128xi1>, vector<8x128xf32>
    %cst_87 = arith.constant 1.000000e+00 : f32
    %225 = vector.broadcast %cst_87 : f32 to vector<8x128xf32>
    %226 = arith.addf %225, %224 : vector<8x128xf32>
    %227 = arith.mulf %189, %226 : vector<8x128xf32>
    %c1_88 = arith.constant 1 : index
    %c0_89 = arith.constant 0 : index
    %c0_90 = arith.constant 0 : index
    %228 = vector.load %arg5[%c1_88, %c0_89, %c0_90] : memref<2x8x128xf32, #tpu.memory_space<vmem>>, vector<1x8x128xf32>
    %229 = vector.shape_cast %228 : vector<1x8x128xf32> to vector<8x128xf32>
    %230 = vector.shape_cast %227 : vector<8x128xf32> to vector<1x8x128xf32>
    tpu.vector_store %arg5[%c1_88, %c0_89, %c0_90], %230 {strides = array<i32>} : memref<2x8x128xf32, #tpu.memory_space<vmem>>, vector<1x8x128xf32>,
    return
  }
  func.func @transform_0(%arg0: i32) -> (i32, i32, i32) {
    %c0_i32 = arith.constant 0 : i32
    %c0_i32_0 = arith.constant 0 : i32
    %c0_i32_1 = arith.constant 0 : i32
    return %arg0, %c0_i32, %c0_i32_0 : i32, i32, i32
  }
  func.func @transform_1(%arg0: i32) -> (i32, i32) {
    %c0_i32 = arith.constant 0 : i32
    %c0_i32_0 = arith.constant 0 : i32
    %c0_i32_1 = arith.constant 0 : i32
    return %c0_i32, %c0_i32_0 : i32, i32
  }
  func.func @transform_2(%arg0: i32) -> (i32, i32) {
    %c0_i32 = arith.constant 0 : i32
    %c0_i32_0 = arith.constant 0 : i32
    %c0_i32_1 = arith.constant 0 : i32
    return %c0_i32, %c0_i32_0 : i32, i32
  }
  func.func @transform_3(%arg0: i32) -> (i32, i32) {
    %c0_i32 = arith.constant 0 : i32
    %c0_i32_0 = arith.constant 0 : i32
    %c0_i32_1 = arith.constant 0 : i32
    return %c0_i32, %c0_i32_0 : i32, i32
  }
  func.func @transform_4(%arg0: i32) -> (i32, i32, i32) {
    %c0_i32 = arith.constant 0 : i32
    %c0_i32_0 = arith.constant 0 : i32
    %c0_i32_1 = arith.constant 0 : i32
    return %arg0, %c0_i32, %c0_i32_0 : i32, i32, i32
  }
}

</mosaic_0001>

<llo_original>
// kernel: tpu_custom_call.1
$region0: #{tpu_custom_call.1}
  #allocation0 [shape = 'u32[]', space=smem, size = 0x4, offset = 0x4, fixed_abs, tag = 'smem constant byte address 0x4 - core index']
  #allocation1 [shape = 'u32[144,128]{1,0:T(1,128)}', space=vmem, size = 0x12000, scoped, tag = 'internal scratch']
  %s0 = inlined_call_operand.hbm [shape: f32[4,8,128], index: 0, kind: input, shape index: {}]
  %s1 = inlined_call_operand.vmem [shape: f32[8,24], index: 1, kind: input, shape index: {}]
  %s2 = inlined_call_operand.hbm [shape: f32[8,24], index: 2, kind: input, shape index: {}]
  %s3 = inlined_call_operand.vmem [shape: f32[8,4], index: 3, kind: input, shape index: {}]
  %s4 = inlined_call_operand.hbm [shape: f32[4,8,128], index: 4, kind: output, shape index: {}]
  %s5 = sld [smem:[#allocation0]]
  $region57: #{tpu_custom_call.1} parent=0
    _
  %s7 = ssub.s32 1, %s5
  %s8 = scalar_select 0, %s7, %s5
  $region1: #{tpu_custom_call.1} parent=0
    #allocation2 [shape = 'u8[16384]{0}', space=vmem, size = 0x4000, scoped, tag = 'input window, operand 0']
    #allocation3 [shape = 's32[2]{0}', space=sflag, size = 0x8, scoped, tag = 'scoped memory for tpu_custom_call.1']
    #allocation4 [shape = 's32[2]{0}', space=sflag, size = 0x8, scoped, tag = 'scoped memory for tpu_custom_call.1']
    #allocation5 [shape = 'u8[4096]{0}', space=vmem, size = 0x1000, scoped, tag = 'input window, operand 2, single buffered']
    #allocation6 [shape = 's32[1]{0}', space=sflag, size = 0x4, scoped, tag = 'scoped memory for tpu_custom_call.1']
    #allocation7 [shape = 'u8[16384]{0}', space=vmem, size = 0x4000, scoped, tag = 'output window, operand 0']
    %9 = vsyncpa [#allocation3], 0
    %s10 = scalar_lea.sflag [#allocation3], 1
    %11 = vsyncpa %s10, 0
    %12 = vsyncpa [#allocation6], 0
    %13 = vsyncpa [#allocation4], 0
    %s14 = scalar_lea.sflag [#allocation4], 1
    %15 = vsyncpa %s14, 0
    loop: start=0, step=1, limit=4
    $region2: #{tpu_custom_call.1} parent=1 // loop_pre_header
      _
    $region3: #{tpu_custom_call.1} parent=1 // loop_header
      %s17 = sphi 0, %s21
      %p18 = scmp.ge.s32.totalorder %s17, 4
      %s27 = sphi 0, %s29
      %s30 = sphi 0, %s27
      %s31 = sphi 0, %s30
      %s47 = sphi 0, %s31
      %s51 = sphi 0, %s51
      %s53 = sphi 0, %s51
      %s54 = sphi 0, %s53
      %s68 = sphi 0, %s54
      %s72 = sphi 0, %s72
      %s74 = sphi 0, %s72
      %s75 = sphi 0, %s74
      %s89 = sphi 0, %s75
      %s93 = sphi 0, %s93
      %s95 = sphi 0, %s93
      %s96 = sphi 0, %s95
      %s110 = sphi 0, %s96
      %s116 = sphi 0, %s118
      %s119 = sphi 0, %s116
      %s120 = sphi 0, %s119
      %s136 = sphi 0, %s120
    $region4: #{tpu_custom_call.1} parent=1 // loop_header_branch
      %20 = sbr.rel (%p18) target = $region8
    $region5: #{tpu_custom_call.1} parent=1 // loop_body
      %s22 = ssub.s32 %s17, 1
      %s23 = ssub.s32 %s17, 2
      %s24 = sadd.s32 %s17, 1
      %s25 = ssub.s32 %s17, %s24
      %p26 = scmp.eq.s32.totalorder %s25, 0
      %s28 = sadd.s32 %s27, 1
      %s29 = scalar_select %p26, %s27, %s28
      %p32 = pneg %p26
      %p33 = scmp.eq.s32.totalorder %s17, 1
      %p34 = por %p32, %p33
      %p35 = scmp.ne.s32.totalorder %s27, %s30
      %p36 = scmp.eq.s32.totalorder %s17, 0
      %p37 = por %p35, %p36
      %p38 = scmp.ne.s32.totalorder %s27, %s30
      %p39 = scmp.eq.s32.totalorder %s22, 1
      %p40 = por %p38, %p39
      %p41 = scmp.ne.s32.totalorder %s30, %s31
      %p42 = scmp.eq.s32.totalorder %s22, 0
      %p43 = por %p41, %p42
      %p44 = scmp.ne.s32.totalorder %s30, %s31
      %p45 = scmp.eq.s32.totalorder %s23, 1
      %p46 = por %p44, %p45
      %p48 = scmp.ne.s32.totalorder %s31, %s47
      %p49 = scmp.eq.s32.totalorder %s23, 0
      %p50 = por %p48, %p49
      %s52 = sadd.s32 %s51, 1
      %p55 = scmp.eq.s32.totalorder %s17, 1
      %p56 = scmp.ne.s32.totalorder %s51, %s53
      %p57 = scmp.eq.s32.totalorder %s17, 0
      %p58 = por %p56, %p57
      %p59 = scmp.ne.s32.totalorder %s51, %s53
      %p60 = scmp.eq.s32.totalorder %s22, 1
      %p61 = por %p59, %p60
      %p62 = scmp.ne.s32.totalorder %s53, %s54
      %p63 = scmp.eq.s32.totalorder %s22, 0
      %p64 = por %p62, %p63
      %p65 = scmp.ne.s32.totalorder %s53, %s54
      %p66 = scmp.eq.s32.totalorder %s23, 1
      %p67 = por %p65, %p66
      %p69 = scmp.ne.s32.totalorder %s54, %s68
      %p70 = scmp.eq.s32.totalorder %s23, 0
      %p71 = por %p69, %p70
      %s73 = sadd.s32 %s72, 1
      %p76 = scmp.eq.s32.totalorder %s17, 1
      %p77 = scmp.ne.s32.totalorder %s72, %s74
      %p78 = scmp.eq.s32.totalorder %s17, 0
      %p79 = por %p77, %p78
      %p80 = scmp.ne.s32.totalorder %s72, %s74
      %p81 = scmp.eq.s32.totalorder %s22, 1
      %p82 = por %p80, %p81
      %p83 = scmp.ne.s32.totalorder %s74, %s75
      %p84 = scmp.eq.s32.totalorder %s22, 0
      %p85 = por %p83, %p84
      %p86 = scmp.ne.s32.totalorder %s74, %s75
      %p87 = scmp.eq.s32.totalorder %s23, 1
      %p88 = por %p86, %p87
      %p90 = scmp.ne.s32.totalorder %s75, %s89
      %p91 = scmp.eq.s32.totalorder %s23, 0
      %p92 = por %p90, %p91
      %s94 = sadd.s32 %s93, 1
      %p97 = scmp.eq.s32.totalorder %s17, 1
      %p98 = scmp.ne.s32.totalorder %s93, %s95
      %p99 = scmp.eq.s32.totalorder %s17, 0
      %p100 = por %p98, %p99
      %p101 = scmp.ne.s32.totalorder %s93, %s95
      %p102 = scmp.eq.s32.totalorder %s22, 1
      %p103 = por %p101, %p102
      %p104 = scmp.ne.s32.totalorder %s95, %s96
      %p105 = scmp.eq.s32.totalorder %s22, 0
      %p106 = por %p104, %p105
      %p107 = scmp.ne.s32.totalorder %s95, %s96
      %p108 = scmp.eq.s32.totalorder %s23, 1
      %p109 = por %p107, %p108
      %p111 = scmp.ne.s32.totalorder %s96, %s110
      %p112 = scmp.eq.s32.totalorder %s23, 0
      %p113 = por %p111, %p112
      %s114 = ssub.s32 %s17, %s24
      %p115 = scmp.eq.s32.totalorder %s114, 0
      %s117 = sadd.s32 %s116, 1
      %s118 = scalar_select %p115, %s116, %s117
      %p121 = pneg %p115
      %p122 = scmp.eq.s32.totalorder %s17, 1
      %p123 = por %p121, %p122
      %p124 = scmp.ne.s32.totalorder %s116, %s119
      %p125 = scmp.eq.s32.totalorder %s17, 0
      %p126 = por %p124, %p125
      %p127 = scmp.ne.s32.totalorder %s116, %s119
      %p128 = scmp.eq.s32.totalorder %s22, 1
      %p129 = por %p127, %p128
      %p130 = scmp.ne.s32.totalorder %s119, %s120
      %p131 = scmp.eq.s32.totalorder %s22, 0
      %p132 = por %p130, %p131
      %p133 = scmp.ne.s32.totalorder %s119, %s120
      %p134 = scmp.eq.s32.totalorder %s23, 1
      %p135 = por %p133, %p134
      %p137 = scmp.ne.s32.totalorder %s120, %s136
      %p138 = scmp.eq.s32.totalorder %s23, 0
      %p139 = por %p137, %p138
      %p140 = scmp.le.s32.totalorder 1, %s17
      %p141 = scmp.lt.s32.totalorder %s17, 3
      %p142 = pnand %p140, %p141
      %p143 = pneg %p142
      // Predicated region
      $region9: #{tpu_custom_call.1} parent=5 // pred_check
        _
      $region10: #{tpu_custom_call.1} parent=5 // pred_check_branch
        %145 = sbr.rel (%p142) target = $region12
      $region11: #{tpu_custom_call.1} parent=5 // pred_region
        %s146 = ssub.s32 %s17, 1
        // Predicated region
        $region13: #{tpu_custom_call.1} parent=11 // pred_check
          %p147 = pneg %p64
        $region14: #{tpu_custom_call.1} parent=11 // pred_check_branch
          %149 = sbr.rel (%p147) target = $region16
        $region15: #{tpu_custom_call.1} parent=11 // pred_region
          _
        $region16: #{tpu_custom_call.1} parent=11 // pred_fallthru
          _
        // Predicated region
        $region17: #{tpu_custom_call.1} parent=11 // pred_check
          %p150 = pneg %p85
        $region18: #{tpu_custom_call.1} parent=11 // pred_check_branch
          %152 = sbr.rel (%p150) target = $region20
        $region19: #{tpu_custom_call.1} parent=11 // pred_region
          %s154 = ssub.s32 128, 128
          %155 = vsyncadd [#allocation6], %s154
          %s157 = sshll.u32 [#allocation5], 4
          %s158 = int_to_ptr.vmem [resolvable:$true] %s157
          %160 = dma.hbm_to_vmem [thread:$0]  %s2, 128, %s158, [#allocation6]
        $region20: #{tpu_custom_call.1} parent=11 // pred_fallthru
          _
        // Predicated region
        $region21: #{tpu_custom_call.1} parent=11 // pred_check
          %p161 = pneg %p106
        $region22: #{tpu_custom_call.1} parent=11 // pred_check_branch
          %163 = sbr.rel (%p161) target = $region24
        $region23: #{tpu_custom_call.1} parent=11 // pred_region
          _
        $region24: #{tpu_custom_call.1} parent=11 // pred_fallthru
          _
      $region12: #{tpu_custom_call.1} parent=5 // pred_fallthru
        _
      %p164 = scmp.lt.s32.totalorder %s17, 2
      // Predicated region
      $region25: #{tpu_custom_call.1} parent=5 // pred_check
        %p165 = pneg %p164
      $region26: #{tpu_custom_call.1} parent=5 // pred_check_branch
        %167 = sbr.rel (%p165) target = $region28
      $region27: #{tpu_custom_call.1} parent=5 // pred_region
        // Predicated region
        $region29: #{tpu_custom_call.1} parent=27 // pred_check
          %p168 = pneg %p37
        $region30: #{tpu_custom_call.1} parent=27 // pred_check_branch
          %170 = sbr.rel (%p168) target = $region32
        $region31: #{tpu_custom_call.1} parent=27 // pred_region
          %s171 = sand.u32 %s27, 1
          %s172 = scalar_lea.sflag [#allocation3], %s171
          %s173 = sand.u32 %s27, 1
          %s174 = smul.addr %s173, 16
          %s175 = scalar_lea.vmem [#allocation2], %s174
          %s176 = smul.u32 2, %s17
          %s178 = ssub.s32 256, 256
          %179 = vsyncadd %s172, %s178
          %s180 = smul.addr %s176, 128
          %s181 = scalar_lea.hbm %s0, %s180
          %s182 = sshll.u32 %s175, 4
          %s183 = int_to_ptr.vmem [resolvable:$true] %s182
          %188 = dma.hbm_to_vmem [thread:$0]  %s181, 256, %s183, %s172, 128, 128, 8
        $region32: #{tpu_custom_call.1} parent=27 // pred_fallthru
          _
      $region28: #{tpu_custom_call.1} parent=5 // pred_fallthru
        _
      %p189 = scmp.le.s32.totalorder 1, %s17
      %p190 = scmp.lt.s32.totalorder %s17, 3
      %p191 = pnand %p189, %p190
      %p192 = pneg %p191
      // Predicated region
      $region33: #{tpu_custom_call.1} parent=5 // pred_check
        _
      $region34: #{tpu_custom_call.1} parent=5 // pred_check_branch
        %194 = sbr.rel (%p191) target = $region36
      $region35: #{tpu_custom_call.1} parent=5 // pred_region
        %s195 = ssub.s32 %s17, 1
        %s196 = sand.u32 %s30, 1
        %s197 = scalar_lea.sflag [#allocation3], %s196
        %s198 = sand.u32 %s30, 1
        %s199 = smul.addr %s198, 16
        %s200 = scalar_lea.vmem [#allocation2], %s199
        // Predicated region
        $region37: #{tpu_custom_call.1} parent=35 // pred_check
          %p201 = pneg %p43
        $region38: #{tpu_custom_call.1} parent=35 // pred_check_branch
          %203 = sbr.rel (%p201) target = $region40
        $region39: #{tpu_custom_call.1} parent=35 // pred_region
          %204 = dma.done %s197, 256
        $region40: #{tpu_custom_call.1} parent=35 // pred_fallthru
          _
        // Predicated region
        $region41: #{tpu_custom_call.1} parent=35 // pred_check
          %p205 = pneg %p85
        $region42: #{tpu_custom_call.1} parent=35 // pred_check_branch
          %207 = sbr.rel (%p205) target = $region44
        $region43: #{tpu_custom_call.1} parent=35 // pred_region
          %208 = dma.done [#allocation6], 128
        $region44: #{tpu_custom_call.1} parent=35 // pred_fallthru
          _
        %s209 = sand.u32 %s30, 1
        %s210 = scalar_lea.sflag [#allocation3], %s209
        %s211 = sand.u32 %s30, 1
        %s212 = smul.addr %s211, 16
        %s213 = scalar_lea.vmem [#allocation2], %s212
        %p214 = pneg %p43
        %p215 = pneg %p40
        %p216 = pneg %p64
        %p217 = pneg %p61
        %p218 = pneg %p85
        %p219 = pneg %p82
        %p220 = pneg %p106
        %p221 = pneg %p103
        %p222 = pneg %p132
        %p223 = pneg %p129
        %s224 = sand.u32 %s119, 1
        %s225 = scalar_lea.sflag [#allocation4], %s224
        %s226 = sand.u32 %s119, 1
        %s227 = smul.addr %s226, 16
        %s228 = scalar_lea.vmem [#allocation7], %s227
        %s229 = smul.u32 2, %s22
        %s230 = smul.u32 2, %s22
        %v231 = vld [vmem:[%s3] sm:$0xff]
        %v232 = vld [vmem:[%s200] sm:$0xff]
        %234 = vrot.lane.b32.xlu0 %v232, 1
        %v235 = vpop.permute.xlu0 %234
        %vm237 = vcmask 7168
        %v238 = vsel %vm237, 0.0, %v235
        %239 = vrot.lane.b32.xlu0 %v232, 127
        %v240 = vpop.permute.xlu0 %239
        %vm242 = vcmask 1039360
        %v243 = vsel %vm242, %v240, 0.0
        %v244 = vld [vmem:[%s1] sm:$0xff]
        %246 = vset.pattern.permute.xlu0 0
        %247 = vperm.xlu0 %246, %v231
        %v248 = vpop.permute.xlu0 %247
        %vm250 = vcmask 195584
        %v252 = vsel %vm250, %v244, 0
        %254 = vmatprep.subr.mxu0 0.0
        %255 = vmatpush1.msra.mxu0 0.0
        %256 = vmatprep.subr.mxu0 0.0
        %257 = vmatpush1.msra.mxu0 0.0
        %258 = vmatprep.subr.mxu0 0.0
        %259 = vmatpush1.msra.mxu0 0.0
        %260 = vmatprep.subr.mxu0 0.0
        %261 = vmatpush1.msra.mxu0 0.0
        %262 = vmatprep.subr.mxu0 0.0
        %263 = vmatpush1.msra.mxu0 0.0
        %264 = vmatprep.subr.mxu0 0.0
        %265 = vmatpush1.msra.mxu0 0.0
        %266 = vmatprep.subr.mxu0 0.0
        %267 = vmatpush1.msra.mxu0 0.0
        %268 = vmatprep.subr.mxu0 0.0
        %269 = vmatpush1.msra.mxu0 0.0
        %270 = vmatprep.subr.mxu0 0.0
        %271 = vmatpush1.msra.mxu0 0.0
        %272 = vmatprep.subr.mxu0 0.0
        %273 = vmatpush1.msra.mxu0 0.0
        %274 = vmatprep.subr.mxu0 0.0
        %275 = vmatpush1.msra.mxu0 0.0
        %276 = vmatprep.subr.mxu0 0.0
        %277 = vmatpush1.msra.mxu0 0.0
        %278 = vmatprep.subr.mxu0 0.0
        %279 = vmatpush1.msra.mxu0 0.0
        %280 = vmatprep.subr.mxu0 0.0
        %281 = vmatpush1.msra.mxu0 %v243
        %282 = vmatprep.subr.mxu0 0.0
        %283 = vmatpush1.msra.mxu0 %v232
        %284 = vmatprep.subr.mxu0 0.0
        %285 = vmatpush1.msra.mxu0 %v238
        %286 = vmatprep.subr.mxu0 0.0
        %287 = vmatpush2.msra.mxu0 0.0
        %288 = vmatprep.subr.mxu0 0.0
        %289 = vmatpush2.msra.mxu0 0.0
        %290 = vmatprep.subr.mxu0 0.0
        %291 = vmatpush2.msra.mxu0 0.0
        %292 = vmatprep.subr.mxu0 0.0
        %293 = vmatpush2.msra.mxu0 0.0
        %294 = vmatprep.subr.mxu0 0.0
        %295 = vmatpush2.msra.mxu0 0.0
        %296 = vmatprep.subr.mxu0 0.0
        %297 = vmatpush2.msra.mxu0 0.0
        %298 = vmatprep.subr.mxu0 0.0
        %299 = vmatpush2.msra.mxu0 0.0
        %300 = vmatprep.subr.mxu0 0.0
        %301 = vmatpush2.msra.mxu0 0.0
        %302 = vmatprep.subr.mxu0 0.0
        %303 = vmatpush2.msra.mxu0 0.0
        %304 = vmatprep.subr.mxu0 0.0
        %305 = vmatpush2.msra.mxu0 0.0
        %306 = vmatprep.subr.mxu0 0.0
        %307 = vmatpush2.msra.mxu0 0.0
        %308 = vmatprep.subr.mxu0 0.0
        %309 = vmatpush2.msra.mxu0 0.0
        %310 = vmatprep.subr.mxu0 0.0
        %311 = vmatpush2.msra.mxu0 0.0
        %312 = vmatprep.subr.mxu0 0.0
        %313 = vmatpush2.msra.mxu0 0.0
        %314 = vmatprep.subr.mxu0 0.0
        %315 = vmatpush2.msra.mxu0 0.0
        %316 = vmatprep.subr.mxu0 0.0
        %317 = vmatpush2.msra.mxu0 0.0
        %318 = vmatprep.mubr.f32.mxu0 0.0
        %319 = vmatmul.mubr.f32.gmra.mxu0 %v252
        %v320 = vpop.f32.mrf.mxu0
        %v321 = vadd.f32 %v248, %v320
        %v322 = vpop.f32.mrf.mxu0
        %323 = vdwg.mxu0
        %324 = vset.pattern.permute.xlu0 2
        %325 = vperm.xlu0 %324, %v231
        %v326 = vpop.permute.xlu0 %325
        %v328 = vmul.f32 %v326, %v232
        %v329 = vadd.f32 %v321, %v328
        %v330 = vmul.f32 %v329, 0.5
        %v331 = vmul.f32 %v329, 0.70710677
        %v332 = vand.u32 2147483647, %v331
        %v333 = vmul.f32 %v332, 0.3275911
        %v334 = vadd.f32 %v333, 1.0
        %v335 = vrcp.pop %v334
        %v336 = vmul.f32 1.0, %v335
        %v337 = vmul.f32 %v336, 1.0614054
        %v338 = vadd.f32 %v337, -1.4531521
        %v339 = vmul.f32 %v338, %v336
        %v340 = vadd.f32 %v339, 1.4214138
        %v341 = vmul.f32 %v340, %v336
        %v342 = vadd.f32 %v341, -0.28449672
        %v343 = vmul.f32 %v342, %v336
        %v344 = vadd.f32 %v343, 0.2548296
        %v345 = vmul.f32 %v344, %v336
        %v346 = vmul.f32 %v332, %v332
        %v347 = vsub.f32 0.0, %v346
        %v348 = vmul.f32 %v347, 1.442695
        %v349 = vpow.pop %v348
        %v350 = vmul.f32 %v345, %v349
        %v351 = vsub.f32 1.0, %v350
        %vm352 = vcmp.ge.f32.partialorder %v331, 0.0
        %v353 = vsub.f32 0.0, %v351
        %v354 = vsel %vm352, %v351, %v353
        %v355 = vadd.f32 %v354, 1.0
        %v356 = vmul.f32 %v330, %v355
        %358 = vrot.lane.b32.xlu0 %v356, 1
        %v359 = vpop.permute.xlu0 %358
        %v361 = vsel %vm237, 0.0, %v359
        %362 = vrot.lane.b32.xlu0 %v356, 127
        %v363 = vpop.permute.xlu0 %362
        %v365 = vsel %vm242, %v363, 0.0
        %v366 = vld [vmem:[#allocation5] sm:$0xff]
        %367 = vset.pattern.permute.xlu0 1
        %368 = vperm.xlu0 %367, %v231
        %v369 = vpop.permute.xlu0 %368
        %v372 = vsel %vm250, %v366, 0
        %374 = vmatprep.subr.mxu0 0.0
        %375 = vmatpush1.msra.mxu0 0.0
        %376 = vmatprep.subr.mxu0 0.0
        %377 = vmatpush1.msra.mxu0 0.0
        %378 = vmatprep.subr.mxu0 0.0
        %379 = vmatpush1.msra.mxu0 0.0
        %380 = vmatprep.subr.mxu0 0.0
        %381 = vmatpush1.msra.mxu0 0.0
        %382 = vmatprep.subr.mxu0 0.0
        %383 = vmatpush1.msra.mxu0 0.0
        %384 = vmatprep.subr.mxu0 0.0
        %385 = vmatpush1.msra.mxu0 0.0
        %386 = vmatprep.subr.mxu0 0.0
        %387 = vmatpush1.msra.mxu0 0.0
        %388 = vmatprep.subr.mxu0 0.0
        %389 = vmatpush1.msra.mxu0 0.0
        %390 = vmatprep.subr.mxu0 0.0
        %391 = vmatpush1.msra.mxu0 0.0
        %392 = vmatprep.subr.mxu0 0.0
        %393 = vmatpush1.msra.mxu0 0.0
        %394 = vmatprep.subr.mxu0 0.0
        %395 = vmatpush1.msra.mxu0 0.0
        %396 = vmatprep.subr.mxu0 0.0
        %397 = vmatpush1.msra.mxu0 0.0
        %398 = vmatprep.subr.mxu0 0.0
        %399 = vmatpush1.msra.mxu0 0.0
        %400 = vmatprep.subr.mxu0 0.0
        %401 = vmatpush1.msra.mxu0 %v365
        %402 = vmatprep.subr.mxu0 0.0
        %403 = vmatpush1.msra.mxu0 %v356
        %404 = vmatprep.subr.mxu0 0.0
        %405 = vmatpush1.msra.mxu0 %v361
        %406 = vmatprep.subr.mxu0 0.0
        %407 = vmatpush2.msra.mxu0 0.0
        %408 = vmatprep.subr.mxu0 0.0
        %409 = vmatpush2.msra.mxu0 0.0
        %410 = vmatprep.subr.mxu0 0.0
        %411 = vmatpush2.msra.mxu0 0.0
        %412 = vmatprep.subr.mxu0 0.0
        %413 = vmatpush2.msra.mxu0 0.0
        %414 = vmatprep.subr.mxu0 0.0
        %415 = vmatpush2.msra.mxu0 0.0
        %416 = vmatprep.subr.mxu0 0.0
        %417 = vmatpush2.msra.mxu0 0.0
        %418 = vmatprep.subr.mxu0 0.0
        %419 = vmatpush2.msra.mxu0 0.0
        %420 = vmatprep.subr.mxu0 0.0
        %421 = vmatpush2.msra.mxu0 0.0
        %422 = vmatprep.subr.mxu0 0.0
        %423 = vmatpush2.msra.mxu0 0.0
        %424 = vmatprep.subr.mxu0 0.0
        %425 = vmatpush2.msra.mxu0 0.0
        %426 = vmatprep.subr.mxu0 0.0
        %427 = vmatpush2.msra.mxu0 0.0
        %428 = vmatprep.subr.mxu0 0.0
        %429 = vmatpush2.msra.mxu0 0.0
        %430 = vmatprep.subr.mxu0 0.0
        %431 = vmatpush2.msra.mxu0 0.0
        %432 = vmatprep.subr.mxu0 0.0
        %433 = vmatpush2.msra.mxu0 0.0
        %434 = vmatprep.subr.mxu0 0.0
        %435 = vmatpush2.msra.mxu0 0.0
        %436 = vmatprep.subr.mxu0 0.0
        %437 = vmatpush2.msra.mxu0 0.0
        %438 = vmatprep.mubr.f32.mxu0 0.0
        %439 = vmatmul.mubr.f32.gmra.mxu0 %v372
        %v440 = vpop.f32.mrf.mxu0
        %v441 = vadd.f32 %v369, %v440
        %v442 = vpop.f32.mrf.mxu0
        %443 = vdwg.mxu0
        %444 = vset.pattern.permute.xlu0 3
        %445 = vperm.xlu0 %444, %v231
        %v446 = vpop.permute.xlu0 %445
        %v448 = vmul.f32 %v446, %v356
        %v449 = vadd.f32 %v441, %v448
        %v450 = vmul.f32 %v449, 0.5
        %v451 = vmul.f32 %v449, 0.70710677
        %v452 = vand.u32 2147483647, %v451
        %v453 = vmul.f32 %v452, 0.3275911
        %v454 = vadd.f32 %v453, 1.0
        %v455 = vrcp.pop %v454
        %v456 = vmul.f32 1.0, %v455
        %v457 = vmul.f32 %v456, 1.0614054
        %v458 = vadd.f32 %v457, -1.4531521
        %v459 = vmul.f32 %v458, %v456
        %v460 = vadd.f32 %v459, 1.4214138
        %v461 = vmul.f32 %v460, %v456
        %v462 = vadd.f32 %v461, -0.28449672
        %v463 = vmul.f32 %v462, %v456
        %v464 = vadd.f32 %v463, 0.2548296
        %v465 = vmul.f32 %v464, %v456
        %v466 = vmul.f32 %v452, %v452
        %v467 = vsub.f32 0.0, %v466
        %v468 = vmul.f32 %v467, 1.442695
        %v469 = vpow.pop %v468
        %v470 = vmul.f32 %v465, %v469
        %v471 = vsub.f32 1.0, %v470
        %vm472 = vcmp.ge.f32.partialorder %v451, 0.0
        %v473 = vsub.f32 0.0, %v471
        %v474 = vsel %vm472, %v471, %v473
        %v475 = vadd.f32 %v474, 1.0
        %v476 = vmul.f32 %v450, %v475
        %477 = vst [vmem:[%s228] sm:$0xff] %v476
        %s478 = scalar_lea.vmem %s200, 8 [#allocation2]
        %v479 = vld [vmem:[%s478] sm:$0xff]
        %481 = vrot.lane.b32.xlu0 %v479, 1
        %v482 = vpop.permute.xlu0 %481
        %v484 = vsel %vm237, 0.0, %v482
        %485 = vrot.lane.b32.xlu0 %v479, 127
        %v486 = vpop.permute.xlu0 %485
        %v488 = vsel %vm242, %v486, 0.0
        %v489 = vld [vmem:[%s1] sm:$0xff]
        %v491 = vsel %vm250, %v489, 0
        %493 = vmatprep.subr.mxu0 0.0
        %494 = vmatpush1.msra.mxu0 0.0
        %495 = vmatprep.subr.mxu0 0.0
        %496 = vmatpush1.msra.mxu0 0.0
        %497 = vmatprep.subr.mxu0 0.0
        %498 = vmatpush1.msra.mxu0 0.0
        %499 = vmatprep.subr.mxu0 0.0
        %500 = vmatpush1.msra.mxu0 0.0
        %501 = vmatprep.subr.mxu0 0.0
        %502 = vmatpush1.msra.mxu0 0.0
        %503 = vmatprep.subr.mxu0 0.0
        %504 = vmatpush1.msra.mxu0 0.0
        %505 = vmatprep.subr.mxu0 0.0
        %506 = vmatpush1.msra.mxu0 0.0
        %507 = vmatprep.subr.mxu0 0.0
        %508 = vmatpush1.msra.mxu0 0.0
        %509 = vmatprep.subr.mxu0 0.0
        %510 = vmatpush1.msra.mxu0 0.0
        %511 = vmatprep.subr.mxu0 0.0
        %512 = vmatpush1.msra.mxu0 0.0
        %513 = vmatprep.subr.mxu0 0.0
        %514 = vmatpush1.msra.mxu0 0.0
        %515 = vmatprep.subr.mxu0 0.0
        %516 = vmatpush1.msra.mxu0 0.0
        %517 = vmatprep.subr.mxu0 0.0
        %518 = vmatpush1.msra.mxu0 0.0
        %519 = vmatprep.subr.mxu0 0.0
        %520 = vmatpush1.msra.mxu0 %v488
        %521 = vmatprep.subr.mxu0 0.0
        %522 = vmatpush1.msra.mxu0 %v479
        %523 = vmatprep.subr.mxu0 0.0
        %524 = vmatpush1.msra.mxu0 %v484
        %525 = vmatprep.subr.mxu0 0.0
        %526 = vmatpush2.msra.mxu0 0.0
        %527 = vmatprep.subr.mxu0 0.0
        %528 = vmatpush2.msra.mxu0 0.0
        %529 = vmatprep.subr.mxu0 0.0
        %530 = vmatpush2.msra.mxu0 0.0
        %531 = vmatprep.subr.mxu0 0.0
        %532 = vmatpush2.msra.mxu0 0.0
        %533 = vmatprep.subr.mxu0 0.0
        %534 = vmatpush2.msra.mxu0 0.0
        %535 = vmatprep.subr.mxu0 0.0
        %536 = vmatpush2.msra.mxu0 0.0
        %537 = vmatprep.subr.mxu0 0.0
        %538 = vmatpush2.msra.mxu0 0.0
        %539 = vmatprep.subr.mxu0 0.0
        %540 = vmatpush2.msra.mxu0 0.0
        %541 = vmatprep.subr.mxu0 0.0
        %542 = vmatpush2.msra.mxu0 0.0
        %543 = vmatprep.subr.mxu0 0.0
        %544 = vmatpush2.msra.mxu0 0.0
        %545 = vmatprep.subr.mxu0 0.0
        %546 = vmatpush2.msra.mxu0 0.0
        %547 = vmatprep.subr.mxu0 0.0
        %548 = vmatpush2.msra.mxu0 0.0
        %549 = vmatprep.subr.mxu0 0.0
        %550 = vmatpush2.msra.mxu0 0.0
        %551 = vmatprep.subr.mxu0 0.0
        %552 = vmatpush2.msra.mxu0 0.0
        %553 = vmatprep.subr.mxu0 0.0
        %554 = vmatpush2.msra.mxu0 0.0
        %555 = vmatprep.subr.mxu0 0.0
        %556 = vmatpush2.msra.mxu0 0.0
        %557 = vmatprep.mubr.f32.mxu0 0.0
        %558 = vmatmul.mubr.f32.gmra.mxu0 %v491
        %v559 = vpop.f32.mrf.mxu0
        %v560 = vadd.f32 %v248, %v559
        %v561 = vpop.f32.mrf.mxu0
        %562 = vdwg.mxu0
        %v563 = vmul.f32 %v326, %v479
        %v564 = vadd.f32 %v560, %v563
        %v565 = vmul.f32 %v564, 0.5
        %v566 = vmul.f32 %v564, 0.70710677
        %v567 = vand.u32 2147483647, %v566
        %v568 = vmul.f32 %v567, 0.3275911
        %v569 = vadd.f32 %v568, 1.0
        %v570 = vrcp.pop %v569
        %v571 = vmul.f32 1.0, %v570
        %v572 = vmul.f32 %v571, 1.0614054
        %v573 = vadd.f32 %v572, -1.4531521
        %v574 = vmul.f32 %v573, %v571
        %v575 = vadd.f32 %v574, 1.4214138
        %v576 = vmul.f32 %v575, %v571
        %v577 = vadd.f32 %v576, -0.28449672
        %v578 = vmul.f32 %v577, %v571
        %v579 = vadd.f32 %v578, 0.2548296
        %v580 = vmul.f32 %v579, %v571
        %v581 = vmul.f32 %v567, %v567
        %v582 = vsub.f32 0.0, %v581
        %v583 = vmul.f32 %v582, 1.442695
        %v584 = vpow.pop %v583
        %v585 = vmul.f32 %v580, %v584
        %v586 = vsub.f32 1.0, %v585
        %vm587 = vcmp.ge.f32.partialorder %v566, 0.0
        %v588 = vsub.f32 0.0, %v586
        %v589 = vsel %vm587, %v586, %v588
        %v590 = vadd.f32 %v589, 1.0
        %v591 = vmul.f32 %v565, %v590
        %593 = vrot.lane.b32.xlu0 %v591, 1
        %v594 = vpop.permute.xlu0 %593
        %v596 = vsel %vm237, 0.0, %v594
        %597 = vrot.lane.b32.xlu0 %v591, 127
        %v598 = vpop.permute.xlu0 %597
        %v600 = vsel %vm242, %v598, 0.0
        %v601 = vld [vmem:[#allocation5] sm:$0xff]
        %v603 = vsel %vm250, %v601, 0
        %605 = vmatprep.subr.mxu0 0.0
        %606 = vmatpush1.msra.mxu0 0.0
        %607 = vmatprep.subr.mxu0 0.0
        %608 = vmatpush1.msra.mxu0 0.0
        %609 = vmatprep.subr.mxu0 0.0
        %610 = vmatpush1.msra.mxu0 0.0
        %611 = vmatprep.subr.mxu0 0.0
        %612 = vmatpush1.msra.mxu0 0.0
        %613 = vmatprep.subr.mxu0 0.0
        %614 = vmatpush1.msra.mxu0 0.0
        %615 = vmatprep.subr.mxu0 0.0
        %616 = vmatpush1.msra.mxu0 0.0
        %617 = vmatprep.subr.mxu0 0.0
        %618 = vmatpush1.msra.mxu0 0.0
        %619 = vmatprep.subr.mxu0 0.0
        %620 = vmatpush1.msra.mxu0 0.0
        %621 = vmatprep.subr.mxu0 0.0
        %622 = vmatpush1.msra.mxu0 0.0
        %623 = vmatprep.subr.mxu0 0.0
        %624 = vmatpush1.msra.mxu0 0.0
        %625 = vmatprep.subr.mxu0 0.0
        %626 = vmatpush1.msra.mxu0 0.0
        %627 = vmatprep.subr.mxu0 0.0
        %628 = vmatpush1.msra.mxu0 0.0
        %629 = vmatprep.subr.mxu0 0.0
        %630 = vmatpush1.msra.mxu0 0.0
        %631 = vmatprep.subr.mxu0 0.0
        %632 = vmatpush1.msra.mxu0 %v600
        %633 = vmatprep.subr.mxu0 0.0
        %634 = vmatpush1.msra.mxu0 %v591
        %635 = vmatprep.subr.mxu0 0.0
        %636 = vmatpush1.msra.mxu0 %v596
        %637 = vmatprep.subr.mxu0 0.0
        %638 = vmatpush2.msra.mxu0 0.0
        %639 = vmatprep.subr.mxu0 0.0
        %640 = vmatpush2.msra.mxu0 0.0
        %641 = vmatprep.subr.mxu0 0.0
        %642 = vmatpush2.msra.mxu0 0.0
        %643 = vmatprep.subr.mxu0 0.0
        %644 = vmatpush2.msra.mxu0 0.0
        %645 = vmatprep.subr.mxu0 0.0
        %646 = vmatpush2.msra.mxu0 0.0
        %647 = vmatprep.subr.mxu0 0.0
        %648 = vmatpush2.msra.mxu0 0.0
        %649 = vmatprep.subr.mxu0 0.0
        %650 = vmatpush2.msra.mxu0 0.0
        %651 = vmatprep.subr.mxu0 0.0
        %652 = vmatpush2.msra.mxu0 0.0
        %653 = vmatprep.subr.mxu0 0.0
        %654 = vmatpush2.msra.mxu0 0.0
        %655 = vmatprep.subr.mxu0 0.0
        %656 = vmatpush2.msra.mxu0 0.0
        %657 = vmatprep.subr.mxu0 0.0
        %658 = vmatpush2.msra.mxu0 0.0
        %659 = vmatprep.subr.mxu0 0.0
        %660 = vmatpush2.msra.mxu0 0.0
        %661 = vmatprep.subr.mxu0 0.0
        %662 = vmatpush2.msra.mxu0 0.0
        %663 = vmatprep.subr.mxu0 0.0
        %664 = vmatpush2.msra.mxu0 0.0
        %665 = vmatprep.subr.mxu0 0.0
        %666 = vmatpush2.msra.mxu0 0.0
        %667 = vmatprep.subr.mxu0 0.0
        %668 = vmatpush2.msra.mxu0 0.0
        %669 = vmatprep.mubr.f32.mxu0 0.0
        %670 = vmatmul.mubr.f32.gmra.mxu0 %v603
        %v671 = vpop.f32.mrf.mxu0
        %v672 = vadd.f32 %v369, %v671
        %v673 = vpop.f32.mrf.mxu0
        %674 = vdwg.mxu0
        %v675 = vmul.f32 %v446, %v591
        %v676 = vadd.f32 %v672, %v675
        %v677 = vmul.f32 %v676, 0.5
        %v678 = vmul.f32 %v676, 0.70710677
        %v679 = vand.u32 2147483647, %v678
        %v680 = vmul.f32 %v679, 0.3275911
        %v681 = vadd.f32 %v680, 1.0
        %v682 = vrcp.pop %v681
        %v683 = vmul.f32 1.0, %v682
        %v684 = vmul.f32 %v683, 1.0614054
        %v685 = vadd.f32 %v684, -1.4531521
        %v686 = vmul.f32 %v685, %v683
        %v687 = vadd.f32 %v686, 1.4214138
        %v688 = vmul.f32 %v687, %v683
        %v689 = vadd.f32 %v688, -0.28449672
        %v690 = vmul.f32 %v689, %v683
        %v691 = vadd.f32 %v690, 0.2548296
        %v692 = vmul.f32 %v691, %v683
        %v693 = vmul.f32 %v679, %v679
        %v694 = vsub.f32 0.0, %v693
        %v695 = vmul.f32 %v694, 1.442695
        %v696 = vpow.pop %v695
        %v697 = vmul.f32 %v692, %v696
        %v698 = vsub.f32 1.0, %v697
        %vm699 = vcmp.ge.f32.partialorder %v678, 0.0
        %v700 = vsub.f32 0.0, %v698
        %v701 = vsel %vm699, %v698, %v700
        %v702 = vadd.f32 %v701, 1.0
        %v703 = vmul.f32 %v677, %v702
        %s704 = scalar_lea.vmem %s228, 8 [#allocation7]
        %705 = vst [vmem:[%s704] sm:$0xff] %v703
        %s706 = sand.u32 %s119, 1
        %s707 = scalar_lea.sflag [#allocation4], %s706
        %s708 = sand.u32 %s119, 1
        %s709 = smul.addr %s708, 16
        %s710 = scalar_lea.vmem [#allocation7], %s709
        // Predicated region
        $region45: #{tpu_custom_call.1} parent=35 // pred_check
          %p711 = pneg %p129
        $region46: #{tpu_custom_call.1} parent=35 // pred_check_branch
          %713 = sbr.rel (%p711) target = $region48
        $region47: #{tpu_custom_call.1} parent=35 // pred_region
          %s714 = smul.u32 2, %s22
          %s716 = ssub.s32 256, 256
          %717 = vsyncadd %s707, %s716
          %s718 = smul.addr %s714, 128
          %s719 = scalar_lea.hbm %s4, %s718
          %s720 = sshll.u32 %s710, 4
          %s721 = int_to_ptr.vmem [resolvable:$true] %s720
          %726 = dma.vmem_to_hbm [thread:$0]  %s721, 256, %s719, %s707, 128, 128, 8
        $region48: #{tpu_custom_call.1} parent=35 // pred_fallthru
          _
      $region36: #{tpu_custom_call.1} parent=5 // pred_fallthru
        _
      %p727 = scmp.le.s32.totalorder 2, %s17
      // Predicated region
      $region49: #{tpu_custom_call.1} parent=5 // pred_check
        %p728 = pneg %p727
      $region50: #{tpu_custom_call.1} parent=5 // pred_check_branch
        %730 = sbr.rel (%p728) target = $region52
      $region51: #{tpu_custom_call.1} parent=5 // pred_region
        %s731 = ssub.s32 %s17, 2
        // Predicated region
        $region53: #{tpu_custom_call.1} parent=51 // pred_check
          %p732 = pneg %p135
        $region54: #{tpu_custom_call.1} parent=51 // pred_check_branch
          %734 = sbr.rel (%p732) target = $region56
        $region55: #{tpu_custom_call.1} parent=51 // pred_region
          %s735 = sand.u32 %s120, 1
          %s736 = scalar_lea.sflag [#allocation4], %s735
          %s737 = sand.u32 %s120, 1
          %s738 = smul.addr %s737, 16
          %s739 = scalar_lea.vmem [#allocation7], %s738
          %740 = dma.done %s736, 256
        $region56: #{tpu_custom_call.1} parent=51 // pred_fallthru
          _
      $region52: #{tpu_custom_call.1} parent=5 // pred_fallthru
        _
    $region6: #{tpu_custom_call.1} parent=1 // loop_footer
      %s21 = sadd.s32 1, %s17
    $region7: #{tpu_custom_call.1} parent=1 // loop_footer_branch
      %16 = sbr.rel target = $region3
    $region8: #{tpu_custom_call.1} parent=1 // loop_exit
      _
    %741 = vsyncpa [#allocation3], 1
    %s742 = scalar_lea.sflag [#allocation3], 1
    %743 = vsyncpa %s742, 1
    %744 = vsyncpa [#allocation6], 1
    %745 = vsyncpa [#allocation4], 1
    %s746 = scalar_lea.sflag [#allocation4], 1
    %747 = vsyncpa %s746, 1

</llo_original>
